<compile_context>
chip_gen: v5e
topology: v5e:2x2
jax: 0.10.0
libtpu: 0.0.40
codegen_flags: <defaults>
</compile_context>

<pallas_src>
import functools

import jax
import jax.numpy as jnp
from jax.experimental import pallas as pl
from jax.experimental.pallas import tpu as pltpu

IN_DIM = 784          # K of layer 1 (kept unpadded; block == full array dim)
HIDDEN_PAD = 256      # 200 padded to a lane multiple / full MXU tile
OUT_PAD = 128         # 10 padded to a lane multiple (lane-dense, unmasked vst)
OUT_DIM = 10
DEFAULT_TILE_B = 2048  # ~24 MiB/step VMEM footprint; sweep to 4096-8192 on v5e/v6e


def _round_up(n, m):
    return (n + m - 1) // m * m


def _leaky_relu(x, slope=0.01):
    return jnp.where(x > 0, x, slope * x)


def mlp_kernel(x_ref, w1_ref, b1_ref, w2_ref, b2_ref, w3_ref, b3_ref, o_ref):
    # Layer 1: cast x to bf16 right before the MXU (x arrives as f32 from HBM,
    # so the wrapper does not burn a separate cast pass). f32 accumulation.
    x_bf = x_ref[...].astype(jnp.bfloat16)
    h1 = jnp.dot(x_bf, w1_ref[...], preferred_element_type=jnp.float32)
    h1 = _leaky_relu(h1 + b1_ref[...])                      # f32 elementwise
    # Layer 2.
    h2 = jnp.dot(h1.astype(jnp.bfloat16), w2_ref[...],
                 preferred_element_type=jnp.float32)
    h2 = _leaky_relu(h2 + b2_ref[...])
    # Layer 3.
    h3 = jnp.dot(h2.astype(jnp.bfloat16), w3_ref[...],
                 preferred_element_type=jnp.float32)
    h3 = _leaky_relu(h3 + b3_ref[...])
    o_ref[...] = h3.astype(o_ref.dtype)                     # bf16 writeback


@functools.partial(jax.jit, static_argnames=("tile_b",))
def mlp_forward(x, params, tile_b=DEFAULT_TILE_B):
    """x: (B, 784) float32.  params: padded bf16 weights / f32 biases."""
    w1, b1, w2, b2, w3, b3 = (params["w1"], params["b1"], params["w2"],
                              params["b2"], params["w3"], params["b3"])
    B, K = x.shape

    # Batch tile: multiple of 16 (bf16 sublane packing), clamped to the batch.
    tb = min(_round_up(tile_b, 16), _round_up(B, 16))
    Bp = _round_up(B, tb)
    xp = x
    if Bp != B:
        # Only the ragged remainder (< tb rows) is padded; no full-tensor copy
        # when B is already a tile multiple.
        xp = jnp.pad(x, ((0, Bp - B), (0, 0)))

    grid = (Bp // tb,)
    # Constant index_map -> the block never changes -> stays resident in VMEM.
    # TODO(synk): on v7x, pipeline_mode=pl.Buffered(1) on these specs would
    # drop their second buffer (~0.6 MiB headroom) if supported by the build.
    resident = lambda arr: pl.BlockSpec(arr.shape, lambda i: (0, 0))

    flops = 2 * Bp * (K * HIDDEN_PAD + HIDDEN_PAD * HIDDEN_PAD
                      + HIDDEN_PAD * OUT_PAD)
    bytes_accessed = (xp.size * 4                                   # f32 x read
                      + (w1.size + w2.size + w3.size) * 2           # bf16 weights
                      + (b1.size + b2.size + b3.size) * 4           # f32 biases
                      + Bp * OUT_PAD * 2)                           # bf16 out

    out = pl.pallas_call(
        mlp_kernel,
        out_shape=jax.ShapeDtypeStruct((Bp, OUT_PAD), jnp.bfloat16),
        grid_spec=pltpu.PrefetchScalarGridSpec(
            num_scalar_prefetch=0,
            grid=grid,
            in_specs=[
                pl.BlockSpec((tb, K), lambda i: (i, 0)),   # activations: tiled
                resident(w1), resident(b1),                # weights/biases: resident
                resident(w2), resident(b2),
                resident(w3), resident(b3),
            ],
            out_specs=pl.BlockSpec((tb, OUT_PAD), lambda i: (i, 0)),
        ),
        compiler_params=pltpu.CompilerParams(
            # megacore / v7x 2-TC sharding over the batch-tile axis; keep the
            # grid length >= 2 on v7x by choosing tile_b <= B/2 there.
            dimension_semantics=("parallel",),
            vmem_limit_bytes=48 * 1024 * 1024,
        ),
        cost_estimate=pl.CostEstimate(
            flops=flops, transcendentals=0, bytes_accessed=bytes_accessed),
    )(xp, w1, b1, w2, b2, w3, b3)

    # Tiny (B, 10) slice + cast back to f32 for the caller.
    return out[:B, :OUT_DIM].astype(jnp.float32)


def _pad_to(a, shape):
    return jnp.pad(a, [(0, t - s) for s, t in zip(a.shape, shape)])


def init_params(key):
    """PyTorch Linear weight is (out, in); we store the transpose (in, out),
    zero-pad feature dims to lane multiples, and cast weights to bf16."""
    k1, k2, k3, k4, k5, k6 = jax.random.split(key, 6)
    scale = 0.05
    w1 = scale * jax.random.normal(k1, (IN_DIM, 200), jnp.float32)
    b1 = scale * jax.random.normal(k2, (1, 200), jnp.float32)
    w2 = scale * jax.random.normal(k3, (200, 200), jnp.float32)
    b2 = scale * jax.random.normal(k4, (1, 200), jnp.float32)
    w3 = scale * jax.random.normal(k5, (200, OUT_DIM), jnp.float32)
    b3 = scale * jax.random.normal(k6, (1, OUT_DIM), jnp.float32)
    return {
        "w1": _pad_to(w1, (IN_DIM, HIDDEN_PAD)).astype(jnp.bfloat16),
        "b1": _pad_to(b1, (1, HIDDEN_PAD)),
        "w2": _pad_to(w2, (HIDDEN_PAD, HIDDEN_PAD)).astype(jnp.bfloat16),
        "b2": _pad_to(b2, (1, HIDDEN_PAD)),
        "w3": _pad_to(w3, (HIDDEN_PAD, OUT_PAD)).astype(jnp.bfloat16),
        "b3": _pad_to(b3, (1, OUT_PAD)),
    }


def mlp_reference(x, p):
    """Pure-JAX reference mirroring the kernel numerics (bf16 dot inputs, f32 acc).
    Note: bf16 weights/activations are an intentional (inference-grade)
    numerics change vs. the f32 PyTorch module."""
    def bdot(a, w):
        return jnp.dot(a.astype(jnp.bfloat16), w,
                       preferred_element_type=jnp.float32)
    h = _leaky_relu(bdot(x, p["w1"]) + p["b1"])
    h = _leaky_relu(bdot(h, p["w2"]) + p["b2"])
    h = _leaky_relu(bdot(h, p["w3"]) + p["b3"])
    return h[:, :OUT_DIM]


if __name__ == "__main__":
    key = jax.random.PRNGKey(0)
    kx, kp = jax.random.split(key)
    B = 8  # module was exercised with (1, 784); batch dim is free
    x = jax.random.normal(kx, (B, IN_DIM), jnp.float32)
    params = init_params(kp)

    out = mlp_forward(x, params)
    out = jax.block_until_ready(out)

    ref = mlp_reference(x, params)
    assert out.shape == (B, OUT_DIM), out.shape
    # Kernel writes bf16 to HBM, so compare at bf16 tolerance.
    assert jnp.allclose(out, ref, atol=2e-2, rtol=2e-2), float(
        jnp.max(jnp.abs(out - ref)))
    print("KERNEL_OK")
</pallas_src>

<mosaic_0001>
module attributes {stable_mosaic.version = 11 : i64} {
  func.func @mlp_kernel(%arg0: i32, %arg1: memref<16x784xf32, #tpu.memory_space<vmem>>, %arg2: memref<784x256xbf16, #tpu.memory_space<vmem>>, %arg3: memref<1x256xf32, #tpu.memory_space<vmem>>, %arg4: memref<256x256xbf16, #tpu.memory_space<vmem>>, %arg5: memref<1x256xf32, #tpu.memory_space<vmem>>, %arg6: memref<256x128xbf16, #tpu.memory_space<vmem>>, %arg7: memref<1x128xf32, #tpu.memory_space<vmem>>, %arg8: memref<16x128xbf16, #tpu.memory_space<vmem>>) attributes {dimension_semantics = [#tpu.dimension_semantics<parallel>], iteration_bounds = array<i64: 1>, scalar_prefetch = 0 : i64, scratch_operands = 0 : i64, tpu.core_type = #tpu.core_type<tc>, window_params = [{transform_indices = @transform_0, window_bounds = array<i64: 16, 784>}, {pipeline_mode = #tpu.pipeline_mode<synchronous>, transform_indices = @transform_1, window_bounds = array<i64: 784, 256>}, {pipeline_mode = #tpu.pipeline_mode<synchronous>, transform_indices = @transform_2, window_bounds = array<i64: 1, 256>}, {pipeline_mode = #tpu.pipeline_mode<synchronous>, transform_indices = @transform_3, window_bounds = array<i64: 256, 256>}, {pipeline_mode = #tpu.pipeline_mode<synchronous>, transform_indices = @transform_4, window_bounds = array<i64: 1, 256>}, {pipeline_mode = #tpu.pipeline_mode<synchronous>, transform_indices = @transform_5, window_bounds = array<i64: 256, 128>}, {pipeline_mode = #tpu.pipeline_mode<synchronous>, transform_indices = @transform_6, window_bounds = array<i64: 1, 128>}, {transform_indices = @transform_7, window_bounds = array<i64: 16, 128>}]} {
    %c0 = arith.constant 0 : index
    %c0_0 = arith.constant 0 : index
    %0 = vector.load %arg1[%c0, %c0_0] : memref<16x784xf32, #tpu.memory_space<vmem>>, vector<16x784xf32>
    %1 = arith.truncf %0 : vector<16x784xf32> to vector<16x784xbf16>
    %c0_1 = arith.constant 0 : index
    %c0_2 = arith.constant 0 : index
    %2 = vector.load %arg2[%c0_1, %c0_2] : memref<784x256xbf16, #tpu.memory_space<vmem>>, vector<784x256xbf16>
    %cst = arith.constant dense<0.000000e+00> : vector<16x256xf32>
    %3 = tpu.matmul %1, %2, %cst {dimension_numbers = #tpu.dot_dimension_numbers<[1], [0], [0], [1], [0, 0, 1, 1], [], []>} : vector<16x784xbf16>, vector<784x256xbf16>, vector<16x256xf32> -> vector<16x256xf32>
    %c0_3 = arith.constant 0 : index
    %c0_4 = arith.constant 0 : index
    %4 = vector.load %arg3[%c0_3, %c0_4] : memref<1x256xf32, #tpu.memory_space<vmem>>, vector<1x256xf32>
    %5 = vector.broadcast %4 : vector<1x256xf32> to vector<16x256xf32>
    %6 = arith.addf %3, %5 : vector<16x256xf32>
    %cst_5 = arith.constant 0.000000e+00 : f32
    %7 = vector.broadcast %cst_5 : f32 to vector<16x256xf32>
    %8 = arith.cmpf ogt, %6, %7 : vector<16x256xf32>
    %cst_6 = arith.constant 0.00999999977 : f32
    %9 = vector.broadcast %cst_6 : f32 to vector<16x256xf32>
    %10 = arith.mulf %9, %6 : vector<16x256xf32>
    %11 = arith.select %8, %6, %10 : vector<16x256xi1>, vector<16x256xf32>
    %12 = arith.truncf %11 : vector<16x256xf32> to vector<16x256xbf16>
    %c0_7 = arith.constant 0 : index
    %c0_8 = arith.constant 0 : index
    %13 = vector.load %arg4[%c0_7, %c0_8] : memref<256x256xbf16, #tpu.memory_space<vmem>>, vector<256x256xbf16>
    %cst_9 = arith.constant dense<0.000000e+00> : vector<16x256xf32>
    %14 = tpu.matmul %12, %13, %cst_9 {dimension_numbers = #tpu.dot_dimension_numbers<[1], [0], [0], [1], [0, 0, 1, 1], [], []>} : vector<16x256xbf16>, vector<256x256xbf16>, vector<16x256xf32> -> vector<16x256xf32>
    %c0_10 = arith.constant 0 : index
    %c0_11 = arith.constant 0 : index
    %15 = vector.load %arg5[%c0_10, %c0_11] : memref<1x256xf32, #tpu.memory_space<vmem>>, vector<1x256xf32>
    %16 = vector.broadcast %15 : vector<1x256xf32> to vector<16x256xf32>
    %17 = arith.addf %14, %16 : vector<16x256xf32>
    %cst_12 = arith.constant 0.000000e+00 : f32
    %18 = vector.broadcast %cst_12 : f32 to vector<16x256xf32>
    %19 = arith.cmpf ogt, %17, %18 : vector<16x256xf32>
    %cst_13 = arith.constant 0.00999999977 : f32
    %20 = vector.broadcast %cst_13 : f32 to vector<16x256xf32>
    %21 = arith.mulf %20, %17 : vector<16x256xf32>
    %22 = arith.select %19, %17, %21 : vector<16x256xi1>, vector<16x256xf32>
    %23 = arith.truncf %22 : vector<16x256xf32> to vector<16x256xbf16>
    %c0_14 = arith.constant 0 : index
    %c0_15 = arith.constant 0 : index
    %24 = vector.load %arg6[%c0_14, %c0_15] : memref<256x128xbf16, #tpu.memory_space<vmem>>, vector<256x128xbf16>
    %cst_16 = arith.constant dense<0.000000e+00> : vector<16x128xf32>
    %25 = tpu.matmul %23, %24, %cst_16 {dimension_numbers = #tpu.dot_dimension_numbers<[1], [0], [0], [1], [0, 0, 1, 1], [], []>} : vector<16x256xbf16>, vector<256x128xbf16>, vector<16x128xf32> -> vector<16x128xf32>
    %c0_17 = arith.constant 0 : index
    %c0_18 = arith.constant 0 : index
    %26 = vector.load %arg7[%c0_17, %c0_18] : memref<1x128xf32, #tpu.memory_space<vmem>>, vector<1x128xf32>
    %27 = vector.broadcast %26 : vector<1x128xf32> to vector<16x128xf32>
    %28 = arith.addf %25, %27 : vector<16x128xf32>
    %cst_19 = arith.constant 0.000000e+00 : f32
    %29 = vector.broadcast %cst_19 : f32 to vector<16x128xf32>
    %30 = arith.cmpf ogt, %28, %29 : vector<16x128xf32>
    %cst_20 = arith.constant 0.00999999977 : f32
    %31 = vector.broadcast %cst_20 : f32 to vector<16x128xf32>
    %32 = arith.mulf %31, %28 : vector<16x128xf32>
    %33 = arith.select %30, %28, %32 : vector<16x128xi1>, vector<16x128xf32>
    %34 = arith.truncf %33 : vector<16x128xf32> to vector<16x128xbf16>
    %c0_21 = arith.constant 0 : index
    %c0_22 = arith.constant 0 : index
    %35 = vector.load %arg8[%c0_21, %c0_22] : memref<16x128xbf16, #tpu.memory_space<vmem>>, vector<16x128xbf16>
    tpu.vector_store %arg8[%c0_21, %c0_22], %34 {strides = array<i32>} : memref<16x128xbf16, #tpu.memory_space<vmem>>, vector<16x128xbf16>,
    return
  }
  func.func @transform_0(%arg0: i32) -> (i32, i32) {
    %c0_i32 = arith.constant 0 : i32
    %c0_i32_0 = arith.constant 0 : i32
    return %arg0, %c0_i32 : i32, i32
  }
  func.func @transform_1(%arg0: i32) -> (i32, i32) {
    %c0_i32 = arith.constant 0 : i32
    %c0_i32_0 = arith.constant 0 : i32
    %c0_i32_1 = arith.constant 0 : i32
    return %c0_i32, %c0_i32_0 : i32, i32
  }
  func.func @transform_2(%arg0: i32) -> (i32, i32) {
    %c0_i32 = arith.constant 0 : i32
    %c0_i32_0 = arith.constant 0 : i32
    %c0_i32_1 = arith.constant 0 : i32
    return %c0_i32, %c0_i32_0 : i32, i32
  }
  func.func @transform_3(%arg0: i32) -> (i32, i32) {
    %c0_i32 = arith.constant 0 : i32
    %c0_i32_0 = arith.constant 0 : i32
    %c0_i32_1 = arith.constant 0 : i32
    return %c0_i32, %c0_i32_0 : i32, i32
  }
  func.func @transform_4(%arg0: i32) -> (i32, i32) {
    %c0_i32 = arith.constant 0 : i32
    %c0_i32_0 = arith.constant 0 : i32
    %c0_i32_1 = arith.constant 0 : i32
    return %c0_i32, %c0_i32_0 : i32, i32
  }
  func.func @transform_5(%arg0: i32) -> (i32, i32) {
    %c0_i32 = arith.constant 0 : i32
    %c0_i32_0 = arith.constant 0 : i32
    %c0_i32_1 = arith.constant 0 : i32
    return %c0_i32, %c0_i32_0 : i32, i32
  }
  func.func @transform_6(%arg0: i32) -> (i32, i32) {
    %c0_i32 = arith.constant 0 : i32
    %c0_i32_0 = arith.constant 0 : i32
    %c0_i32_1 = arith.constant 0 : i32
    return %c0_i32, %c0_i32_0 : i32, i32
  }
  func.func @transform_7(%arg0: i32) -> (i32, i32) {
    %c0_i32 = arith.constant 0 : i32
    %c0_i32_0 = arith.constant 0 : i32
    return %arg0, %c0_i32 : i32, i32
  }
}

</mosaic_0001>

<llo_original>
// kernel: mlp_forward.1
$region0: #{mlp_forward.1}
  #allocation0 [shape = 'u32[]', space=smem, size = 0x4, offset = 0x4, fixed_abs, tag = 'smem constant byte address 0x4 - core index']
  #allocation1 [shape = 'u32[72,128]{1,0:T(1,128)}', space=vmem, size = 0x9000, scoped, tag = 'internal scratch']
  %s0 = inlined_call_operand.vmem [shape: f32[16,784], index: 0, kind: input, shape index: {}]
  %s1 = inlined_call_operand.hbm [shape: bf16[784,256], index: 1, kind: input, shape index: {}]
  %s2 = inlined_call_operand.vmem [shape: f32[1,256], index: 2, kind: input, shape index: {}]
  %s3 = inlined_call_operand.hbm [shape: bf16[256,256], index: 3, kind: input, shape index: {}]
  %s4 = inlined_call_operand.vmem [shape: f32[1,256], index: 4, kind: input, shape index: {}]
  %s5 = inlined_call_operand.vmem [shape: bf16[256,128], index: 5, kind: input, shape index: {}]
  %s6 = inlined_call_operand.vmem [shape: f32[1,128], index: 6, kind: input, shape index: {}]
  %s7 = inlined_call_operand.vmem [shape: bf16[16,128], index: 7, kind: output, shape index: {}]
  %s8 = sld [smem:[#allocation0]]
  $region46: #{mlp_forward.1} parent=0
    _
  %s10 = ssub.s32 1, %s8
  %s11 = scalar_select 0, %s10, %s8
  $region1: #{mlp_forward.1} parent=0
    #allocation2 [shape = 'u8[401408]{0}', space=vmem, size = 0x62000, scoped, tag = 'input window, operand 1, single buffered']
    #allocation3 [shape = 's32[1]{0}', space=sflag, size = 0x4, scoped, tag = 'scoped memory for mlp_forward.1']
    #allocation4 [shape = 'u8[131072]{0}', space=vmem, size = 0x20000, scoped, tag = 'input window, operand 3, single buffered']
    #allocation5 [shape = 's32[1]{0}', space=sflag, size = 0x4, scoped, tag = 'scoped memory for mlp_forward.1']
    %12 = vsyncpa [#allocation3], 0
    %13 = vsyncpa [#allocation5], 0
    // Predicated region
    $region2: #{mlp_forward.1} parent=1 // pred_check
      _
    $region3: #{mlp_forward.1} parent=1 // pred_check_branch
      %15 = sbr.rel (0) target = $region5
    $region4: #{mlp_forward.1} parent=1 // pred_region
      _
    $region5: #{mlp_forward.1} parent=1 // pred_fallthru
      _
    // Predicated region
    $region6: #{mlp_forward.1} parent=1 // pred_check
      _
    $region7: #{mlp_forward.1} parent=1 // pred_check_branch
      %17 = sbr.rel (0) target = $region9
    $region8: #{mlp_forward.1} parent=1 // pred_region
      %19 = vsyncadd [#allocation3], 0
      %s20 = sshll.u32 %s1, 4
      %s21 = int_to_ptr.hbm [resolvable:$true] %s20
      %s22 = sshll.u32 [#allocation2], 4
      %s23 = int_to_ptr.vmem [resolvable:$true] %s22
      %28 = dma.hbm_to_vmem [thread:$0]  %s21, 12544, %s23, [#allocation3], 128, 128, 8
    $region9: #{mlp_forward.1} parent=1 // pred_fallthru
      _
    // Predicated region
    $region10: #{mlp_forward.1} parent=1 // pred_check
      _
    $region11: #{mlp_forward.1} parent=1 // pred_check_branch
      %30 = sbr.rel (0) target = $region13
    $region12: #{mlp_forward.1} parent=1 // pred_region
      _
    $region13: #{mlp_forward.1} parent=1 // pred_fallthru
      _
    // Predicated region
    $region14: #{mlp_forward.1} parent=1 // pred_check
      _
    $region15: #{mlp_forward.1} parent=1 // pred_check_branch
      %32 = sbr.rel (0) target = $region17
    $region16: #{mlp_forward.1} parent=1 // pred_region
      %34 = vsyncadd [#allocation5], 0
      %s35 = sshll.u32 %s3, 4
      %s36 = int_to_ptr.hbm [resolvable:$true] %s35
      %s37 = sshll.u32 [#allocation4], 4
      %s38 = int_to_ptr.vmem [resolvable:$true] %s37
      %43 = dma.hbm_to_vmem [thread:$0]  %s36, 4096, %s38, [#allocation5], 128, 128, 8
    $region17: #{mlp_forward.1} parent=1 // pred_fallthru
      _
    // Predicated region
    $region18: #{mlp_forward.1} parent=1 // pred_check
      _
    $region19: #{mlp_forward.1} parent=1 // pred_check_branch
      %45 = sbr.rel (0) target = $region21
    $region20: #{mlp_forward.1} parent=1 // pred_region
      _
    $region21: #{mlp_forward.1} parent=1 // pred_fallthru
      _
    // Predicated region
    $region22: #{mlp_forward.1} parent=1 // pred_check
      _
    $region23: #{mlp_forward.1} parent=1 // pred_check_branch
      %47 = sbr.rel (0) target = $region25
    $region24: #{mlp_forward.1} parent=1 // pred_region
      _
    $region25: #{mlp_forward.1} parent=1 // pred_fallthru
      _
    // Predicated region
    $region26: #{mlp_forward.1} parent=1 // pred_check
      _
    $region27: #{mlp_forward.1} parent=1 // pred_check_branch
      %49 = sbr.rel (0) target = $region29
    $region28: #{mlp_forward.1} parent=1 // pred_region
      _
    $region29: #{mlp_forward.1} parent=1 // pred_fallthru
      _
    // Predicated region
    $region30: #{mlp_forward.1} parent=1 // pred_check
      _
    $region31: #{mlp_forward.1} parent=1 // pred_check_branch
      %51 = sbr.rel (0) target = $region33
    $region32: #{mlp_forward.1} parent=1 // pred_region
      %53 = dma.done [#allocation3], 12544
    $region33: #{mlp_forward.1} parent=1 // pred_fallthru
      _
    // Predicated region
    $region34: #{mlp_forward.1} parent=1 // pred_check
      _
    $region35: #{mlp_forward.1} parent=1 // pred_check_branch
      %55 = sbr.rel (0) target = $region37
    $region36: #{mlp_forward.1} parent=1 // pred_region
      %57 = dma.done [#allocation5], 4096
    $region37: #{mlp_forward.1} parent=1 // pred_fallthru
      _
    %v59 = vld [vmem:[%s0] sm:$0xff]
    %v60 = vld [vmem:[%s0 + $0x8] sm:$0xff]
    %v61 = vld [vmem:[%s0 + $0x10] sm:$0xff]
    %v62 = vld [vmem:[%s0 + $0x18] sm:$0xff]
    %v63 = vld [vmem:[%s0 + $0x20] sm:$0xff]
    %v64 = vld [vmem:[%s0 + $0x28] sm:$0xff]
    %v65 = vld [vmem:[%s0 + $0x30] sm:$0xff]
    %v66 = vld [vmem:[%s0 + $0x38] sm:$0xff]
    %v67 = vld [vmem:[%s0 + $0x40] sm:$0xff]
    %v68 = vld [vmem:[%s0 + $0x48] sm:$0xff]
    %v69 = vld [vmem:[%s0 + $0x50] sm:$0xff]
    %v70 = vld [vmem:[%s0 + $0x58] sm:$0xff]
    %v71 = vld [vmem:[%s0 + $0x60] sm:$0xff]
    %v72 = vld [vmem:[%s0 + $0x68] sm:$0xff]
    %v73 = vpack.c.bf16 %v66, %v59
    %v74 = vpack.c.bf16 %v67, %v60
    %v75 = vpack.c.bf16 %v68, %v61
    %v76 = vpack.c.bf16 %v69, %v62
    %v77 = vpack.c.bf16 %v70, %v63
    %v78 = vpack.c.bf16 %v71, %v64
    %v79 = vpack.c.bf16 %v72, %v65
    %v80 = vld [vmem:[#allocation2] sm:$0xff]
    %v81 = vld [vmem:[#allocation2 + $0x8] sm:$0xff]
    %v82 = vld [vmem:[#allocation2 + $0x10] sm:$0xff]
    %v83 = vld [vmem:[#allocation2 + $0x18] sm:$0xff]
    %v84 = vld [vmem:[#allocation2 + $0x20] sm:$0xff]
    %v85 = vld [vmem:[#allocation2 + $0x28] sm:$0xff]
    %v86 = vld [vmem:[#allocation2 + $0x30] sm:$0xff]
    %v87 = vld [vmem:[#allocation2 + $0x38] sm:$0xff]
    %v88 = vld [vmem:[#allocation2 + $0x40] sm:$0xff]
    %v89 = vld [vmem:[#allocation2 + $0x48] sm:$0xff]
    %v90 = vld [vmem:[#allocation2 + $0x50] sm:$0xff]
    %v91 = vld [vmem:[#allocation2 + $0x58] sm:$0xff]
    %v92 = vld [vmem:[#allocation2 + $0x60] sm:$0xff]
    %v93 = vld [vmem:[#allocation2 + $0x68] sm:$0xff]
    %v94 = vld [vmem:[#allocation2 + $0x70] sm:$0xff]
    %v95 = vld [vmem:[#allocation2 + $0x78] sm:$0xff]
    %v96 = vld [vmem:[#allocation2 + $0x80] sm:$0xff]
    %v97 = vld [vmem:[#allocation2 + $0x88] sm:$0xff]
    %v98 = vld [vmem:[#allocation2 + $0x90] sm:$0xff]
    %v99 = vld [vmem:[#allocation2 + $0x98] sm:$0xff]
    %v100 = vld [vmem:[#allocation2 + $0xa0] sm:$0xff]
    %v101 = vld [vmem:[#allocation2 + $0xa8] sm:$0xff]
    %v102 = vld [vmem:[#allocation2 + $0xb0] sm:$0xff]
    %v103 = vld [vmem:[#allocation2 + $0xb8] sm:$0xff]
    %v104 = vld [vmem:[#allocation2 + $0xc0] sm:$0xff]
    %v105 = vld [vmem:[#allocation2 + $0xc8] sm:$0xff]
    %v106 = vld [vmem:[#allocation2 + $0xd0] sm:$0xff]
    %v107 = vld [vmem:[#allocation2 + $0xd8] sm:$0xff]
    %v108 = vld [vmem:[#allocation2 + $0xe0] sm:$0xff]
    %v109 = vld [vmem:[#allocation2 + $0xe8] sm:$0xff]
    %v110 = vld [vmem:[#allocation2 + $0xf0] sm:$0xff]
    %v111 = vld [vmem:[#allocation2 + $0xf8] sm:$0xff]
    %v112 = vld [vmem:[#allocation2 + $0x100] sm:$0xff]
    %v113 = vld [vmem:[#allocation2 + $0x108] sm:$0xff]
    %v114 = vld [vmem:[#allocation2 + $0x110] sm:$0xff]
    %v115 = vld [vmem:[#allocation2 + $0x118] sm:$0xff]
    %v116 = vld [vmem:[#allocation2 + $0x120] sm:$0xff]
    %v117 = vld [vmem:[#allocation2 + $0x128] sm:$0xff]
    %v118 = vld [vmem:[#allocation2 + $0x130] sm:$0xff]
    %v119 = vld [vmem:[#allocation2 + $0x138] sm:$0xff]
    %v120 = vld [vmem:[#allocation2 + $0x140] sm:$0xff]
    %v121 = vld [vmem:[#allocation2 + $0x148] sm:$0xff]
    %v122 = vld [vmem:[#allocation2 + $0x150] sm:$0xff]
    %v123 = vld [vmem:[#allocation2 + $0x158] sm:$0xff]
    %v124 = vld [vmem:[#allocation2 + $0x160] sm:$0xff]
    %v125 = vld [vmem:[#allocation2 + $0x168] sm:$0xff]
    %v126 = vld [vmem:[#allocation2 + $0x170] sm:$0xff]
    %v127 = vld [vmem:[#allocation2 + $0x178] sm:$0xff]
    %v128 = vld [vmem:[#allocation2 + $0x180] sm:$0xff]
    %v129 = vld [vmem:[#allocation2 + $0x188] sm:$0xff]
    %v130 = vld [vmem:[#allocation2 + $0x190] sm:$0xff]
    %v131 = vld [vmem:[#allocation2 + $0x198] sm:$0xff]
    %v132 = vld [vmem:[#allocation2 + $0x1a0] sm:$0xff]
    %v133 = vld [vmem:[#allocation2 + $0x1a8] sm:$0xff]
    %v134 = vld [vmem:[#allocation2 + $0x1b0] sm:$0xff]
    %v135 = vld [vmem:[#allocation2 + $0x1b8] sm:$0xff]
    %v136 = vld [vmem:[#allocation2 + $0x1c0] sm:$0xff]
    %v137 = vld [vmem:[#allocation2 + $0x1c8] sm:$0xff]
    %v138 = vld [vmem:[#allocation2 + $0x1d0] sm:$0xff]
    %v139 = vld [vmem:[#allocation2 + $0x1d8] sm:$0xff]
    %v140 = vld [vmem:[#allocation2 + $0x1e0] sm:$0xff]
    %v141 = vld [vmem:[#allocation2 + $0x1e8] sm:$0xff]
    %v142 = vld [vmem:[#allocation2 + $0x1f0] sm:$0xff]
    %v143 = vld [vmem:[#allocation2 + $0x1f8] sm:$0xff]
    %v144 = vld [vmem:[#allocation2 + $0x200] sm:$0xff]
    %v145 = vld [vmem:[#allocation2 + $0x208] sm:$0xff]
    %v146 = vld [vmem:[#allocation2 + $0x210] sm:$0xff]
    %v147 = vld [vmem:[#allocation2 + $0x218] sm:$0xff]
    %v148 = vld [vmem:[#allocation2 + $0x220] sm:$0xff]
    %v149 = vld [vmem:[#allocation2 + $0x228] sm:$0xff]
    %v150 = vld [vmem:[#allocation2 + $0x230] sm:$0xff]
    %v151 = vld [vmem:[#allocation2 + $0x238] sm:$0xff]
    %v152 = vld [vmem:[#allocation2 + $0x240] sm:$0xff]
    %v153 = vld [vmem:[#allocation2 + $0x248] sm:$0xff]
    %v154 = vld [vmem:[#allocation2 + $0x250] sm:$0xff]
    %v155 = vld [vmem:[#allocation2 + $0x258] sm:$0xff]
    %v156 = vld [vmem:[#allocation2 + $0x260] sm:$0xff]
    %v157 = vld [vmem:[#allocation2 + $0x268] sm:$0xff]
    %v158 = vld [vmem:[#allocation2 + $0x270] sm:$0xff]
    %v159 = vld [vmem:[#allocation2 + $0x278] sm:$0xff]
    %v160 = vld [vmem:[#allocation2 + $0x280] sm:$0xff]
    %v161 = vld [vmem:[#allocation2 + $0x288] sm:$0xff]
    %v162 = vld [vmem:[#allocation2 + $0x290] sm:$0xff]
    %v163 = vld [vmem:[#allocation2 + $0x298] sm:$0xff]
    %v164 = vld [vmem:[#allocation2 + $0x2a0] sm:$0xff]
    %v165 = vld [vmem:[#allocation2 + $0x2a8] sm:$0xff]
    %v166 = vld [vmem:[#allocation2 + $0x2b0] sm:$0xff]
    %v167 = vld [vmem:[#allocation2 + $0x2b8] sm:$0xff]
    %v168 = vld [vmem:[#allocation2 + $0x2c0] sm:$0xff]
    %v169 = vld [vmem:[#allocation2 + $0x2c8] sm:$0xff]
    %v170 = vld [vmem:[#allocation2 + $0x2d0] sm:$0xff]
    %v171 = vld [vmem:[#allocation2 + $0x2d8] sm:$0xff]
    %v172 = vld [vmem:[#allocation2 + $0x2e0] sm:$0xff]
    %v173 = vld [vmem:[#allocation2 + $0x2e8] sm:$0xff]
    %v174 = vld [vmem:[#allocation2 + $0x2f0] sm:$0xff]
    %v175 = vld [vmem:[#allocation2 + $0x2f8] sm:$0xff]
    %v176 = vld [vmem:[#allocation2 + $0x300] sm:$0xff]
    %v177 = vld [vmem:[#allocation2 + $0x308] sm:$0xff]
    %v178 = vld [vmem:[%s2] sm:$0x3]
    %v180 = vperm.slane %v178, 0
    %v181 = vperm.slane %v178, 1
    %v282 = vunpack.c.l.b16 %v80
    %v283 = vunpack.c.h.b16 %v80
    %v284 = vunpack.c.l.b16 %v81
    %v285 = vunpack.c.h.b16 %v81
    %v286 = vunpack.c.l.b16 %v82
    %v287 = vunpack.c.h.b16 %v82
    %v288 = vunpack.c.l.b16 %v83
    %v289 = vunpack.c.h.b16 %v83
    %v290 = vunpack.c.l.b16 %v84
    %v291 = vunpack.c.h.b16 %v84
    %v292 = vunpack.c.l.b16 %v85
    %v293 = vunpack.c.h.b16 %v85
    %v294 = vunpack.c.l.b16 %v86
    %v295 = vunpack.c.h.b16 %v86
    %v296 = vunpack.c.l.b16 %v87
    %v297 = vunpack.c.h.b16 %v87
    %v298 = vunpack.c.l.b16 %v88
    %v299 = vunpack.c.h.b16 %v88
    %v300 = vunpack.c.l.b16 %v89
    %v301 = vunpack.c.h.b16 %v89
    %v302 = vunpack.c.l.b16 %v90
    %v303 = vunpack.c.h.b16 %v90
    %v304 = vunpack.c.l.b16 %v91
    %v305 = vunpack.c.h.b16 %v91
    %v306 = vunpack.c.l.b16 %v92
    %v307 = vunpack.c.h.b16 %v92
    %v308 = vunpack.c.l.b16 %v93
    %v309 = vunpack.c.h.b16 %v93
    %v310 = vunpack.c.l.b16 %v94
    %v311 = vunpack.c.h.b16 %v94
    %v312 = vunpack.c.l.b16 %v95
    %v313 = vunpack.c.h.b16 %v95
    %v314 = vunpack.c.l.b16 %v96
    %v315 = vunpack.c.h.b16 %v96
    %v316 = vunpack.c.l.b16 %v97
    %v317 = vunpack.c.h.b16 %v97
    %v318 = vunpack.c.l.b16 %v98
    %v319 = vunpack.c.h.b16 %v98
    %v320 = vunpack.c.l.b16 %v99
    %v321 = vunpack.c.h.b16 %v99
    %v322 = vunpack.c.l.b16 %v100
    %v323 = vunpack.c.h.b16 %v100
    %v324 = vunpack.c.l.b16 %v101
    %v325 = vunpack.c.h.b16 %v101
    %v326 = vunpack.c.l.b16 %v102
    %v327 = vunpack.c.h.b16 %v102
    %v328 = vunpack.c.l.b16 %v103
    %v329 = vunpack.c.h.b16 %v103
    %v330 = vunpack.c.l.b16 %v104
    %v331 = vunpack.c.h.b16 %v104
    %v332 = vunpack.c.l.b16 %v105
    %v333 = vunpack.c.h.b16 %v105
    %v334 = vunpack.c.l.b16 %v106
    %v335 = vunpack.c.h.b16 %v106
    %v336 = vunpack.c.l.b16 %v107
    %v337 = vunpack.c.h.b16 %v107
    %v338 = vunpack.c.l.b16 %v108
    %v339 = vunpack.c.h.b16 %v108
    %v340 = vunpack.c.l.b16 %v109
    %v341 = vunpack.c.h.b16 %v109
    %v342 = vunpack.c.l.b16 %v110
    %v343 = vunpack.c.h.b16 %v110
    %v344 = vunpack.c.l.b16 %v111
    %v345 = vunpack.c.h.b16 %v111
    %v346 = vunpack.c.l.b16 %v112
    %v347 = vunpack.c.h.b16 %v112
    %v348 = vunpack.c.l.b16 %v113
    %v349 = vunpack.c.h.b16 %v113
    %v350 = vunpack.c.l.b16 %v114
    %v351 = vunpack.c.h.b16 %v114
    %v352 = vunpack.c.l.b16 %v115
    %v353 = vunpack.c.h.b16 %v115
    %v354 = vunpack.c.l.b16 %v116
    %v355 = vunpack.c.h.b16 %v116
    %v356 = vunpack.c.l.b16 %v117
    %v357 = vunpack.c.h.b16 %v117
    %v358 = vunpack.c.l.b16 %v118
    %v359 = vunpack.c.h.b16 %v118
    %v360 = vunpack.c.l.b16 %v119
    %v361 = vunpack.c.h.b16 %v119
    %v362 = vunpack.c.l.b16 %v120
    %v363 = vunpack.c.h.b16 %v120
    %v364 = vunpack.c.l.b16 %v121
    %v365 = vunpack.c.h.b16 %v121
    %v366 = vunpack.c.l.b16 %v122
    %v367 = vunpack.c.h.b16 %v122
    %v368 = vunpack.c.l.b16 %v123
    %v369 = vunpack.c.h.b16 %v123
    %v370 = vunpack.c.l.b16 %v124
    %v371 = vunpack.c.h.b16 %v124
    %v372 = vunpack.c.l.b16 %v125
    %v373 = vunpack.c.h.b16 %v125
    %v374 = vunpack.c.l.b16 %v126
    %v375 = vunpack.c.h.b16 %v126
    %v376 = vunpack.c.l.b16 %v127
    %v377 = vunpack.c.h.b16 %v127
    %v378 = vunpack.c.l.b16 %v128
    %v379 = vunpack.c.h.b16 %v128
    %v380 = vunpack.c.l.b16 %v129
    %v381 = vunpack.c.h.b16 %v129
    %v382 = vunpack.c.l.b16 %v130
    %v383 = vunpack.c.h.b16 %v130
    %v384 = vunpack.c.l.b16 %v131
    %v385 = vunpack.c.h.b16 %v131
    %v386 = vunpack.c.l.b16 %v132
    %v387 = vunpack.c.h.b16 %v132
    %v388 = vunpack.c.l.b16 %v133
    %v389 = vunpack.c.h.b16 %v133
    %v390 = vunpack.c.l.b16 %v134
    %v391 = vunpack.c.h.b16 %v134
    %v392 = vunpack.c.l.b16 %v135
    %v393 = vunpack.c.h.b16 %v135
    %v394 = vunpack.c.l.b16 %v136
    %v395 = vunpack.c.h.b16 %v136
    %v396 = vunpack.c.l.b16 %v137
    %v397 = vunpack.c.h.b16 %v137
    %v398 = vunpack.c.l.b16 %v138
    %v399 = vunpack.c.h.b16 %v138
    %v400 = vunpack.c.l.b16 %v139
    %v401 = vunpack.c.h.b16 %v139
    %v402 = vunpack.c.l.b16 %v140
    %v403 = vunpack.c.h.b16 %v140
    %v404 = vunpack.c.l.b16 %v141
    %v405 = vunpack.c.h.b16 %v141
    %v406 = vunpack.c.l.b16 %v142
    %v407 = vunpack.c.h.b16 %v142
    %v408 = vunpack.c.l.b16 %v143
    %v409 = vunpack.c.h.b16 %v143
    %v410 = vunpack.c.l.b16 %v144
    %v411 = vunpack.c.h.b16 %v144
    %v412 = vunpack.c.l.b16 %v145
    %v413 = vunpack.c.h.b16 %v145
    %v414 = vunpack.c.l.b16 %v146
    %v415 = vunpack.c.h.b16 %v146
    %v416 = vunpack.c.l.b16 %v147
    %v417 = vunpack.c.h.b16 %v147
    %v418 = vunpack.c.l.b16 %v148
    %v419 = vunpack.c.h.b16 %v148
    %v420 = vunpack.c.l.b16 %v149
    %v421 = vunpack.c.h.b16 %v149
    %v422 = vunpack.c.l.b16 %v150
    %v423 = vunpack.c.h.b16 %v150
    %v424 = vunpack.c.l.b16 %v151
    %v425 = vunpack.c.h.b16 %v151
    %v426 = vunpack.c.l.b16 %v152
    %v427 = vunpack.c.h.b16 %v152
    %v428 = vunpack.c.l.b16 %v153
    %v429 = vunpack.c.h.b16 %v153
    %v430 = vunpack.c.l.b16 %v154
    %v431 = vunpack.c.h.b16 %v154
    %v432 = vunpack.c.l.b16 %v155
    %v433 = vunpack.c.h.b16 %v155
    %v434 = vunpack.c.l.b16 %v156
    %v435 = vunpack.c.h.b16 %v156
    %v436 = vunpack.c.l.b16 %v157
    %v437 = vunpack.c.h.b16 %v157
    %v438 = vunpack.c.l.b16 %v158
    %v439 = vunpack.c.h.b16 %v158
    %v440 = vunpack.c.l.b16 %v159
    %v441 = vunpack.c.h.b16 %v159
    %v442 = vunpack.c.l.b16 %v160
    %v443 = vunpack.c.h.b16 %v160
    %v444 = vunpack.c.l.b16 %v161
    %v445 = vunpack.c.h.b16 %v161
    %v446 = vunpack.c.l.b16 %v162
    %v447 = vunpack.c.h.b16 %v162
    %v448 = vunpack.c.l.b16 %v163
    %v449 = vunpack.c.h.b16 %v163
    %v450 = vunpack.c.l.b16 %v164
    %v451 = vunpack.c.h.b16 %v164
    %v452 = vunpack.c.l.b16 %v165
    %v453 = vunpack.c.h.b16 %v165
    %v454 = vunpack.c.l.b16 %v166
    %v455 = vunpack.c.h.b16 %v166
    %v456 = vunpack.c.l.b16 %v167
    %v457 = vunpack.c.h.b16 %v167
    %v458 = vunpack.c.l.b16 %v168
    %v459 = vunpack.c.h.b16 %v168
    %v460 = vunpack.c.l.b16 %v169
    %v461 = vunpack.c.h.b16 %v169
    %v462 = vunpack.c.l.b16 %v170
    %v463 = vunpack.c.h.b16 %v170
    %v464 = vunpack.c.l.b16 %v171
    %v465 = vunpack.c.h.b16 %v171
    %v466 = vunpack.c.l.b16 %v172
    %v467 = vunpack.c.h.b16 %v172
    %v468 = vunpack.c.l.b16 %v173
    %v469 = vunpack.c.h.b16 %v173
    %v470 = vunpack.c.l.b16 %v174
    %v471 = vunpack.c.h.b16 %v174
    %v472 = vunpack.c.l.b16 %v175
    %v473 = vunpack.c.h.b16 %v175
    %v474 = vunpack.c.l.b16 %v176
    %v475 = vunpack.c.h.b16 %v176
    %v476 = vunpack.c.l.b16 %v177
    %v477 = vunpack.c.h.b16 %v177
    %v478 = vpack.c.b16 %v284, %v282
    %v479 = vpack.c.b16 %v285, %v283
    %v480 = vpack.c.b16 %v288, %v286
    %v481 = vpack.c.b16 %v289, %v287
    %v482 = vpack.c.b16 %v292, %v290
    %v483 = vpack.c.b16 %v293, %v291
    %v484 = vpack.c.b16 %v296, %v294
    %v485 = vpack.c.b16 %v297, %v295
    %v486 = vpack.c.b16 %v300, %v298
    %v487 = vpack.c.b16 %v301, %v299
    %v488 = vpack.c.b16 %v304, %v302
    %v489 = vpack.c.b16 %v305, %v303
    %v490 = vpack.c.b16 %v308, %v306
    %v491 = vpack.c.b16 %v309, %v307
    %v492 = vpack.c.b16 %v312, %v310
    %v493 = vpack.c.b16 %v313, %v311
    %v494 = vpack.c.b16 %v316, %v314
    %v495 = vpack.c.b16 %v317, %v315
    %v496 = vpack.c.b16 %v320, %v318
    %v497 = vpack.c.b16 %v321, %v319
    %v498 = vpack.c.b16 %v324, %v322
    %v499 = vpack.c.b16 %v325, %v323
    %v500 = vpack.c.b16 %v328, %v326
    %v501 = vpack.c.b16 %v329, %v327
    %v502 = vpack.c.b16 %v332, %v330
    %v503 = vpack.c.b16 %v333, %v331
    %v504 = vpack.c.b16 %v336, %v334
    %v505 = vpack.c.b16 %v337, %v335
    %v506 = vpack.c.b16 %v340, %v338
    %v507 = vpack.c.b16 %v341, %v339
    %v508 = vpack.c.b16 %v344, %v342
    %v509 = vpack.c.b16 %v345, %v343
    %v510 = vpack.c.b16 %v348, %v346
    %v511 = vpack.c.b16 %v349, %v347
    %v512 = vpack.c.b16 %v352, %v350
    %v513 = vpack.c.b16 %v353, %v351
    %v514 = vpack.c.b16 %v356, %v354
    %v515 = vpack.c.b16 %v357, %v355
    %v516 = vpack.c.b16 %v360, %v358
    %v517 = vpack.c.b16 %v361, %v359
    %v518 = vpack.c.b16 %v364, %v362
    %v519 = vpack.c.b16 %v365, %v363
    %v520 = vpack.c.b16 %v368, %v366
    %v521 = vpack.c.b16 %v369, %v367
    %v522 = vpack.c.b16 %v372, %v370
    %v523 = vpack.c.b16 %v373, %v371
    %v524 = vpack.c.b16 %v376, %v374
    %v525 = vpack.c.b16 %v377, %v375
    %v526 = vpack.c.b16 %v380, %v378
    %v527 = vpack.c.b16 %v381, %v379
    %v528 = vpack.c.b16 %v384, %v382
    %v529 = vpack.c.b16 %v385, %v383
    %v530 = vpack.c.b16 %v388, %v386
    %v531 = vpack.c.b16 %v389, %v387
    %v532 = vpack.c.b16 %v392, %v390
    %v533 = vpack.c.b16 %v393, %v391
    %v534 = vpack.c.b16 %v396, %v394
    %v535 = vpack.c.b16 %v397, %v395
    %v536 = vpack.c.b16 %v400, %v398
    %v537 = vpack.c.b16 %v401, %v399
    %v538 = vpack.c.b16 %v404, %v402
    %v539 = vpack.c.b16 %v405, %v403
    %v540 = vpack.c.b16 %v408, %v406
    %v541 = vpack.c.b16 %v409, %v407
    %v542 = vpack.c.b16 %v412, %v410
    %v543 = vpack.c.b16 %v413, %v411
    %v544 = vpack.c.b16 %v416, %v414
    %v545 = vpack.c.b16 %v417, %v415
    %v546 = vpack.c.b16 %v420, %v418
    %v547 = vpack.c.b16 %v421, %v419
    %v548 = vpack.c.b16 %v424, %v422
    %v549 = vpack.c.b16 %v425, %v423
    %v550 = vpack.c.b16 %v428, %v426
    %v551 = vpack.c.b16 %v429, %v427
    %v552 = vpack.c.b16 %v432, %v430
    %v553 = vpack.c.b16 %v433, %v431
    %v554 = vpack.c.b16 %v436, %v434
    %v555 = vpack.c.b16 %v437, %v435
    %v556 = vpack.c.b16 %v440, %v438
    %v557 = vpack.c.b16 %v441, %v439
    %v558 = vpack.c.b16 %v444, %v442
    %v559 = vpack.c.b16 %v445, %v443
    %v560 = vpack.c.b16 %v448, %v446
    %v561 = vpack.c.b16 %v449, %v447
    %v562 = vpack.c.b16 %v452, %v450
    %v563 = vpack.c.b16 %v453, %v451
    %v564 = vpack.c.b16 %v456, %v454
    %v565 = vpack.c.b16 %v457, %v455
    %v566 = vpack.c.b16 %v460, %v458
    %v567 = vpack.c.b16 %v461, %v459
    %v568 = vpack.c.b16 %v464, %v462
    %v569 = vpack.c.b16 %v465, %v463
    %v570 = vpack.c.b16 %v468, %v466
    %v571 = vpack.c.b16 %v469, %v467
    %v572 = vpack.c.b16 %v472, %v470
    %v573 = vpack.c.b16 %v473, %v471
    %v574 = vpack.c.b16 %v476, %v474
    %v575 = vpack.c.b16 %v477, %v475
    %vm674 = vcmask 130048
    %v676 = vsel %vm674, %v79, 0
    %678 = vmatpush.bf16.msra.mxu0 %v492
    %679 = vmatpush.bf16.msra.mxu0 %v490
    %680 = vmatpush.bf16.msra.mxu0 %v488
    %681 = vmatpush.bf16.msra.mxu0 %v486
    %682 = vmatpush.bf16.msra.mxu0 %v484
    %683 = vmatpush.bf16.msra.mxu0 %v482
    %684 = vmatpush.bf16.msra.mxu0 %v480
    %685 = vmatpush.bf16.msra.mxu0 %v478
    %686 = vmatmul.bf16.gmra.mxu0 %v73
    %v687 = vpop.f32.mrf.mxu0
    %v688 = vadd.f32 %v180, %v687
    %v689 = vpop.f32.mrf.mxu0
    %v690 = vadd.f32 %v180, %v689
    %691 = vdwg.mxu0
    %692 = vmatpush.bf16.msra.mxu0 %v508
    %693 = vmatpush.bf16.msra.mxu0 %v506
    %694 = vmatpush.bf16.msra.mxu0 %v504
    %695 = vmatpush.bf16.msra.mxu0 %v502
    %696 = vmatpush.bf16.msra.mxu0 %v500
    %697 = vmatpush.bf16.msra.mxu0 %v498
    %698 = vmatpush.bf16.msra.mxu0 %v496
    %699 = vmatpush.bf16.msra.mxu0 %v494
    %700 = vmatmul.bf16.gmra.mxu0 %v74
    %v701 = vpop.f32.mrf.mxu0
    %v702 = vadd.f32 %v688, %v701
    %v703 = vpop.f32.mrf.mxu0
    %v704 = vadd.f32 %v690, %v703
    %705 = vdwg.mxu0
    %706 = vmatpush.bf16.msra.mxu0 %v524
    %707 = vmatpush.bf16.msra.mxu0 %v522
    %708 = vmatpush.bf16.msra.mxu0 %v520
    %709 = vmatpush.bf16.msra.mxu0 %v518
    %710 = vmatpush.bf16.msra.mxu0 %v516
    %711 = vmatpush.bf16.msra.mxu0 %v514
    %712 = vmatpush.bf16.msra.mxu0 %v512
    %713 = vmatpush.bf16.msra.mxu0 %v510
    %714 = vmatmul.bf16.gmra.mxu0 %v75
    %v715 = vpop.f32.mrf.mxu0
    %v716 = vadd.f32 %v702, %v715
    %v717 = vpop.f32.mrf.mxu0
    %v718 = vadd.f32 %v704, %v717
    %719 = vdwg.mxu0
    %720 = vmatpush.bf16.msra.mxu0 %v540
    %721 = vmatpush.bf16.msra.mxu0 %v538
    %722 = vmatpush.bf16.msra.mxu0 %v536
    %723 = vmatpush.bf16.msra.mxu0 %v534
    %724 = vmatpush.bf16.msra.mxu0 %v532
    %725 = vmatpush.bf16.msra.mxu0 %v530
    %726 = vmatpush.bf16.msra.mxu0 %v528
    %727 = vmatpush.bf16.msra.mxu0 %v526
    %728 = vmatmul.bf16.gmra.mxu0 %v76
    %v729 = vpop.f32.mrf.mxu0
    %v730 = vadd.f32 %v716, %v729
    %v731 = vpop.f32.mrf.mxu0
    %v732 = vadd.f32 %v718, %v731
    %733 = vdwg.mxu0
    %734 = vmatpush.bf16.msra.mxu0 %v556
    %735 = vmatpush.bf16.msra.mxu0 %v554
    %736 = vmatpush.bf16.msra.mxu0 %v552
    %737 = vmatpush.bf16.msra.mxu0 %v550
    %738 = vmatpush.bf16.msra.mxu0 %v548
    %739 = vmatpush.bf16.msra.mxu0 %v546
    %740 = vmatpush.bf16.msra.mxu0 %v544
    %741 = vmatpush.bf16.msra.mxu0 %v542
    %742 = vmatmul.bf16.gmra.mxu0 %v77
    %v743 = vpop.f32.mrf.mxu0
    %v744 = vadd.f32 %v730, %v743
    %v745 = vpop.f32.mrf.mxu0
    %v746 = vadd.f32 %v732, %v745
    %747 = vdwg.mxu0
    %748 = vmatpush.bf16.msra.mxu0 %v572
    %749 = vmatpush.bf16.msra.mxu0 %v570
    %750 = vmatpush.bf16.msra.mxu0 %v568
    %751 = vmatpush.bf16.msra.mxu0 %v566
    %752 = vmatpush.bf16.msra.mxu0 %v564
    %753 = vmatpush.bf16.msra.mxu0 %v562
    %754 = vmatpush.bf16.msra.mxu0 %v560
    %755 = vmatpush.bf16.msra.mxu0 %v558
    %756 = vmatmul.bf16.gmra.mxu0 %v78
    %v757 = vpop.f32.mrf.mxu0
    %v758 = vadd.f32 %v744, %v757
    %v759 = vpop.f32.mrf.mxu0
    %v760 = vadd.f32 %v746, %v759
    %761 = vdwg.mxu0
    %762 = vmatpush.bf16.msra.mxu0 0
    %763 = vmatpush.bf16.msra.mxu0 0
    %764 = vmatpush.bf16.msra.mxu0 0
    %765 = vmatpush.bf16.msra.mxu0 0
    %766 = vmatpush.bf16.msra.mxu0 0
    %767 = vmatpush.bf16.msra.mxu0 0
    %768 = vmatpush.bf16.msra.mxu0 0
    %769 = vmatpush.bf16.msra.mxu0 %v574
    %770 = vmatmul.bf16.gmra.mxu0 %v676
    %v771 = vpop.f32.mrf.mxu0
    %v772 = vadd.f32 %v758, %v771
    %v773 = vpop.f32.mrf.mxu0
    %v774 = vadd.f32 %v760, %v773
    %775 = vdwg.mxu0
    %776 = vmatpush.bf16.msra.mxu0 %v493
    %777 = vmatpush.bf16.msra.mxu0 %v491
    %778 = vmatpush.bf16.msra.mxu0 %v489
    %779 = vmatpush.bf16.msra.mxu0 %v487
    %780 = vmatpush.bf16.msra.mxu0 %v485
    %781 = vmatpush.bf16.msra.mxu0 %v483
    %782 = vmatpush.bf16.msra.mxu0 %v481
    %783 = vmatpush.bf16.msra.mxu0 %v479
    %784 = vmatmul.bf16.gmra.mxu0 %v73
    %v785 = vpop.f32.mrf.mxu0
    %v786 = vadd.f32 %v181, %v785
    %v787 = vpop.f32.mrf.mxu0
    %v788 = vadd.f32 %v181, %v787
    %789 = vdwg.mxu0
    %790 = vmatpush.bf16.msra.mxu0 %v509
    %791 = vmatpush.bf16.msra.mxu0 %v507
    %792 = vmatpush.bf16.msra.mxu0 %v505
    %793 = vmatpush.bf16.msra.mxu0 %v503
    %794 = vmatpush.bf16.msra.mxu0 %v501
    %795 = vmatpush.bf16.msra.mxu0 %v499
    %796 = vmatpush.bf16.msra.mxu0 %v497
    %797 = vmatpush.bf16.msra.mxu0 %v495
    %798 = vmatmul.bf16.gmra.mxu0 %v74
    %v799 = vpop.f32.mrf.mxu0
    %v800 = vadd.f32 %v786, %v799
    %v801 = vpop.f32.mrf.mxu0
    %v802 = vadd.f32 %v788, %v801
    %803 = vdwg.mxu0
    %804 = vmatpush.bf16.msra.mxu0 %v525
    %805 = vmatpush.bf16.msra.mxu0 %v523
    %806 = vmatpush.bf16.msra.mxu0 %v521
    %807 = vmatpush.bf16.msra.mxu0 %v519
    %808 = vmatpush.bf16.msra.mxu0 %v517
    %809 = vmatpush.bf16.msra.mxu0 %v515
    %810 = vmatpush.bf16.msra.mxu0 %v513
    %811 = vmatpush.bf16.msra.mxu0 %v511
    %812 = vmatmul.bf16.gmra.mxu0 %v75
    %v813 = vpop.f32.mrf.mxu0
    %v814 = vadd.f32 %v800, %v813
    %v815 = vpop.f32.mrf.mxu0
    %v816 = vadd.f32 %v802, %v815
    %817 = vdwg.mxu0
    %818 = vmatpush.bf16.msra.mxu0 %v541
    %819 = vmatpush.bf16.msra.mxu0 %v539
    %820 = vmatpush.bf16.msra.mxu0 %v537
    %821 = vmatpush.bf16.msra.mxu0 %v535
    %822 = vmatpush.bf16.msra.mxu0 %v533
    %823 = vmatpush.bf16.msra.mxu0 %v531
    %824 = vmatpush.bf16.msra.mxu0 %v529
    %825 = vmatpush.bf16.msra.mxu0 %v527
    %826 = vmatmul.bf16.gmra.mxu0 %v76
    %v827 = vpop.f32.mrf.mxu0
    %v828 = vadd.f32 %v814, %v827
    %v829 = vpop.f32.mrf.mxu0
    %v830 = vadd.f32 %v816, %v829
    %831 = vdwg.mxu0
    %832 = vmatpush.bf16.msra.mxu0 %v557
    %833 = vmatpush.bf16.msra.mxu0 %v555
    %834 = vmatpush.bf16.msra.mxu0 %v553
    %835 = vmatpush.bf16.msra.mxu0 %v551
    %836 = vmatpush.bf16.msra.mxu0 %v549
    %837 = vmatpush.bf16.msra.mxu0 %v547
    %838 = vmatpush.bf16.msra.mxu0 %v545
    %839 = vmatpush.bf16.msra.mxu0 %v543
    %840 = vmatmul.bf16.gmra.mxu0 %v77
    %v841 = vpop.f32.mrf.mxu0
    %v842 = vadd.f32 %v828, %v841
    %v843 = vpop.f32.mrf.mxu0
    %v844 = vadd.f32 %v830, %v843
    %845 = vdwg.mxu0
    %846 = vmatpush.bf16.msra.mxu0 %v573
    %847 = vmatpush.bf16.msra.mxu0 %v571
    %848 = vmatpush.bf16.msra.mxu0 %v569
    %849 = vmatpush.bf16.msra.mxu0 %v567
    %850 = vmatpush.bf16.msra.mxu0 %v565
    %851 = vmatpush.bf16.msra.mxu0 %v563
    %852 = vmatpush.bf16.msra.mxu0 %v561
    %853 = vmatpush.bf16.msra.mxu0 %v559
    %854 = vmatmul.bf16.gmra.mxu0 %v78
    %v855 = vpop.f32.mrf.mxu0
    %v856 = vadd.f32 %v842, %v855
    %v857 = vpop.f32.mrf.mxu0
    %v858 = vadd.f32 %v844, %v857
    %859 = vdwg.mxu0
    %860 = vmatpush.bf16.msra.mxu0 0
    %861 = vmatpush.bf16.msra.mxu0 0
    %862 = vmatpush.bf16.msra.mxu0 0
    %863 = vmatpush.bf16.msra.mxu0 0
    %864 = vmatpush.bf16.msra.mxu0 0
    %865 = vmatpush.bf16.msra.mxu0 0
    %866 = vmatpush.bf16.msra.mxu0 0
    %867 = vmatpush.bf16.msra.mxu0 %v575
    %868 = vmatmul.bf16.gmra.mxu0 %v676
    %v869 = vpop.f32.mrf.mxu0
    %v870 = vadd.f32 %v856, %v869
    %v871 = vpop.f32.mrf.mxu0
    %v872 = vadd.f32 %v858, %v871
    %873 = vdwg.mxu0
    %vm874 = vcmp.gt.f32.partialorder %v772, 0.0
    %vm875 = vcmp.gt.f32.partialorder %v870, 0.0
    %vm876 = vcmp.gt.f32.partialorder %v774, 0.0
    %vm877 = vcmp.gt.f32.partialorder %v872, 0.0
    %v878 = vmul.f32 %v772, 0.01
    %v879 = vmul.f32 %v870, 0.01
    %v880 = vmul.f32 %v774, 0.01
    %v881 = vmul.f32 %v872, 0.01
    %v882 = vsel %vm874, %v772, %v878
    %v883 = vsel %vm875, %v870, %v879
    %v884 = vsel %vm876, %v774, %v880
    %v885 = vsel %vm877, %v872, %v881
    %v886 = vpack.c.bf16 %v884, %v882
    %v887 = vpack.c.bf16 %v885, %v883
    %v888 = vld [vmem:[#allocation4] sm:$0xff]
    %v889 = vld [vmem:[#allocation4 + $0x8] sm:$0xff]
    %v890 = vld [vmem:[#allocation4 + $0x10] sm:$0xff]
    %v891 = vld [vmem:[#allocation4 + $0x18] sm:$0xff]
    %v892 = vld [vmem:[#allocation4 + $0x20] sm:$0xff]
    %v893 = vld [vmem:[#allocation4 + $0x28] sm:$0xff]
    %v894 = vld [vmem:[#allocation4 + $0x30] sm:$0xff]
    %v895 = vld [vmem:[#allocation4 + $0x38] sm:$0xff]
    %v896 = vld [vmem:[#allocation4 + $0x40] sm:$0xff]
    %v897 = vld [vmem:[#allocation4 + $0x48] sm:$0xff]
    %v898 = vld [vmem:[#allocation4 + $0x50] sm:$0xff]
    %v899 = vld [vmem:[#allocation4 + $0x58] sm:$0xff]
    %v900 = vld [vmem:[#allocation4 + $0x60] sm:$0xff]
    %v901 = vld [vmem:[#allocation4 + $0x68] sm:$0xff]
    %v902 = vld [vmem:[#allocation4 + $0x70] sm:$0xff]
    %v903 = vld [vmem:[#allocation4 + $0x78] sm:$0xff]
    %v904 = vld [vmem:[#allocation4 + $0x80] sm:$0xff]
    %v905 = vld [vmem:[#allocation4 + $0x88] sm:$0xff]
    %v906 = vld [vmem:[#allocation4 + $0x90] sm:$0xff]
    %v907 = vld [vmem:[#allocation4 + $0x98] sm:$0xff]
    %v908 = vld [vmem:[#allocation4 + $0xa0] sm:$0xff]
    %v909 = vld [vmem:[#allocation4 + $0xa8] sm:$0xff]
    %v910 = vld [vmem:[#allocation4 + $0xb0] sm:$0xff]
    %v911 = vld [vmem:[#allocation4 + $0xb8] sm:$0xff]
    %v912 = vld [vmem:[#allocation4 + $0xc0] sm:$0xff]
    %v913 = vld [vmem:[#allocation4 + $0xc8] sm:$0xff]
    %v914 = vld [vmem:[#allocation4 + $0xd0] sm:$0xff]
    %v915 = vld [vmem:[#allocation4 + $0xd8] sm:$0xff]
    %v916 = vld [vmem:[#allocation4 + $0xe0] sm:$0xff]
    %v917 = vld [vmem:[#allocation4 + $0xe8] sm:$0xff]
    %v918 = vld [vmem:[#allocation4 + $0xf0] sm:$0xff]
    %v919 = vld [vmem:[#allocation4 + $0xf8] sm:$0xff]
    %v920 = vld [vmem:[%s4] sm:$0x3]
    %v922 = vperm.slane %v920, 0
    %v923 = vperm.slane %v920, 1
    %v958 = vunpack.c.l.b16 %v888
    %v959 = vunpack.c.h.b16 %v888
    %v960 = vunpack.c.l.b16 %v889
    %v961 = vunpack.c.h.b16 %v889
    %v962 = vunpack.c.l.b16 %v890
    %v963 = vunpack.c.h.b16 %v890
    %v964 = vunpack.c.l.b16 %v891
    %v965 = vunpack.c.h.b16 %v891
    %v966 = vunpack.c.l.b16 %v892
    %v967 = vunpack.c.h.b16 %v892
    %v968 = vunpack.c.l.b16 %v893
    %v969 = vunpack.c.h.b16 %v893
    %v970 = vunpack.c.l.b16 %v894
    %v971 = vunpack.c.h.b16 %v894
    %v972 = vunpack.c.l.b16 %v895
    %v973 = vunpack.c.h.b16 %v895
    %v974 = vunpack.c.l.b16 %v896
    %v975 = vunpack.c.h.b16 %v896
    %v976 = vunpack.c.l.b16 %v897
    %v977 = vunpack.c.h.b16 %v897
    %v978 = vunpack.c.l.b16 %v898
    %v979 = vunpack.c.h.b16 %v898
    %v980 = vunpack.c.l.b16 %v899
    %v981 = vunpack.c.h.b16 %v899
    %v982 = vunpack.c.l.b16 %v900
    %v983 = vunpack.c.h.b16 %v900
    %v984 = vunpack.c.l.b16 %v901
    %v985 = vunpack.c.h.b16 %v901
    %v986 = vunpack.c.l.b16 %v902
    %v987 = vunpack.c.h.b16 %v902
    %v988 = vunpack.c.l.b16 %v903
    %v989 = vunpack.c.h.b16 %v903
    %v990 = vunpack.c.l.b16 %v904
    %v991 = vunpack.c.h.b16 %v904
    %v992 = vunpack.c.l.b16 %v905
    %v993 = vunpack.c.h.b16 %v905
    %v994 = vunpack.c.l.b16 %v906
    %v995 = vunpack.c.h.b16 %v906
    %v996 = vunpack.c.l.b16 %v907
    %v997 = vunpack.c.h.b16 %v907
    %v998 = vunpack.c.l.b16 %v908
    %v999 = vunpack.c.h.b16 %v908
    %v1000 = vunpack.c.l.b16 %v909
    %v1001 = vunpack.c.h.b16 %v909
    %v1002 = vunpack.c.l.b16 %v910
    %v1003 = vunpack.c.h.b16 %v910
    %v1004 = vunpack.c.l.b16 %v911
    %v1005 = vunpack.c.h.b16 %v911
    %v1006 = vunpack.c.l.b16 %v912
    %v1007 = vunpack.c.h.b16 %v912
    %v1008 = vunpack.c.l.b16 %v913
    %v1009 = vunpack.c.h.b16 %v913
    %v1010 = vunpack.c.l.b16 %v914
    %v1011 = vunpack.c.h.b16 %v914
    %v1012 = vunpack.c.l.b16 %v915
    %v1013 = vunpack.c.h.b16 %v915
    %v1014 = vunpack.c.l.b16 %v916
    %v1015 = vunpack.c.h.b16 %v916
    %v1016 = vunpack.c.l.b16 %v917
    %v1017 = vunpack.c.h.b16 %v917
    %v1018 = vunpack.c.l.b16 %v918
    %v1019 = vunpack.c.h.b16 %v918
    %v1020 = vunpack.c.l.b16 %v919
    %v1021 = vunpack.c.h.b16 %v919
    %v1022 = vpack.c.b16 %v960, %v958
    %v1023 = vpack.c.b16 %v961, %v959
    %v1024 = vpack.c.b16 %v964, %v962
    %v1025 = vpack.c.b16 %v965, %v963
    %v1026 = vpack.c.b16 %v968, %v966
    %v1027 = vpack.c.b16 %v969, %v967
    %v1028 = vpack.c.b16 %v972, %v970
    %v1029 = vpack.c.b16 %v973, %v971
    %v1030 = vpack.c.b16 %v976, %v974
    %v1031 = vpack.c.b16 %v977, %v975
    %v1032 = vpack.c.b16 %v980, %v978
    %v1033 = vpack.c.b16 %v981, %v979
    %v1034 = vpack.c.b16 %v984, %v982
    %v1035 = vpack.c.b16 %v985, %v983
    %v1036 = vpack.c.b16 %v988, %v986
    %v1037 = vpack.c.b16 %v989, %v987
    %v1038 = vpack.c.b16 %v992, %v990
    %v1039 = vpack.c.b16 %v993, %v991
    %v1040 = vpack.c.b16 %v996, %v994
    %v1041 = vpack.c.b16 %v997, %v995
    %v1042 = vpack.c.b16 %v1000, %v998
    %v1043 = vpack.c.b16 %v1001, %v999
    %v1044 = vpack.c.b16 %v1004, %v1002
    %v1045 = vpack.c.b16 %v1005, %v1003
    %v1046 = vpack.c.b16 %v1008, %v1006
    %v1047 = vpack.c.b16 %v1009, %v1007
    %v1048 = vpack.c.b16 %v1012, %v1010
    %v1049 = vpack.c.b16 %v1013, %v1011
    %v1050 = vpack.c.b16 %v1016, %v1014
    %v1051 = vpack.c.b16 %v1017, %v1015
    %v1052 = vpack.c.b16 %v1020, %v1018
    %v1053 = vpack.c.b16 %v1021, %v1019
    %1086 = vmatpush.bf16.msra.mxu0 %v1036
    %1087 = vmatpush.bf16.msra.mxu0 %v1034
    %1088 = vmatpush.bf16.msra.mxu0 %v1032
    %1089 = vmatpush.bf16.msra.mxu0 %v1030
    %1090 = vmatpush.bf16.msra.mxu0 %v1028
    %1091 = vmatpush.bf16.msra.mxu0 %v1026
    %1092 = vmatpush.bf16.msra.mxu0 %v1024
    %1093 = vmatpush.bf16.msra.mxu0 %v1022
    %1094 = vmatmul.bf16.gmra.mxu0 %v886
    %v1095 = vpop.f32.mrf.mxu0
    %v1096 = vadd.f32 %v922, %v1095
    %v1097 = vpop.f32.mrf.mxu0
    %v1098 = vadd.f32 %v922, %v1097
    %1099 = vdwg.mxu0
    %1100 = vmatpush.bf16.msra.mxu0 %v1052
    %1101 = vmatpush.bf16.msra.mxu0 %v1050
    %1102 = vmatpush.bf16.msra.mxu0 %v1048
    %1103 = vmatpush.bf16.msra.mxu0 %v1046
    %1104 = vmatpush.bf16.msra.mxu0 %v1044
    %1105 = vmatpush.bf16.msra.mxu0 %v1042
    %1106 = vmatpush.bf16.msra.mxu0 %v1040
    %1107 = vmatpush.bf16.msra.mxu0 %v1038
    %1108 = vmatmul.bf16.gmra.mxu0 %v887
    %v1109 = vpop.f32.mrf.mxu0
    %v1110 = vadd.f32 %v1096, %v1109
    %v1111 = vpop.f32.mrf.mxu0
    %v1112 = vadd.f32 %v1098, %v1111
    %1113 = vdwg.mxu0
    %1114 = vmatpush.bf16.msra.mxu0 %v1037
    %1115 = vmatpush.bf16.msra.mxu0 %v1035
    %1116 = vmatpush.bf16.msra.mxu0 %v1033
    %1117 = vmatpush.bf16.msra.mxu0 %v1031
    %1118 = vmatpush.bf16.msra.mxu0 %v1029
    %1119 = vmatpush.bf16.msra.mxu0 %v1027
    %1120 = vmatpush.bf16.msra.mxu0 %v1025
    %1121 = vmatpush.bf16.msra.mxu0 %v1023
    %1122 = vmatmul.bf16.gmra.mxu0 %v886
    %v1123 = vpop.f32.mrf.mxu0
    %v1124 = vadd.f32 %v923, %v1123
    %v1125 = vpop.f32.mrf.mxu0
    %v1126 = vadd.f32 %v923, %v1125
    %1127 = vdwg.mxu0
    %1128 = vmatpush.bf16.msra.mxu0 %v1053
    %1129 = vmatpush.bf16.msra.mxu0 %v1051
    %1130 = vmatpush.bf16.msra.mxu0 %v1049
    %1131 = vmatpush.bf16.msra.mxu0 %v1047
    %1132 = vmatpush.bf16.msra.mxu0 %v1045
    %1133 = vmatpush.bf16.msra.mxu0 %v1043
    %1134 = vmatpush.bf16.msra.mxu0 %v1041
    %1135 = vmatpush.bf16.msra.mxu0 %v1039
    %1136 = vmatmul.bf16.gmra.mxu0 %v887
    %v1137 = vpop.f32.mrf.mxu0
    %v1138 = vadd.f32 %v1124, %v1137
    %v1139 = vpop.f32.mrf.mxu0
    %v1140 = vadd.f32 %v1126, %v1139
    %1141 = vdwg.mxu0
    %vm1142 = vcmp.gt.f32.partialorder %v1110, 0.0
    %vm1143 = vcmp.gt.f32.partialorder %v1138, 0.0
    %vm1144 = vcmp.gt.f32.partialorder %v1112, 0.0
    %vm1145 = vcmp.gt.f32.partialorder %v1140, 0.0
    %v1146 = vmul.f32 %v1110, 0.01
    %v1147 = vmul.f32 %v1138, 0.01
    %v1148 = vmul.f32 %v1112, 0.01
    %v1149 = vmul.f32 %v1140, 0.01
    %v1150 = vsel %vm1142, %v1110, %v1146
    %v1151 = vsel %vm1143, %v1138, %v1147
    %v1152 = vsel %vm1144, %v1112, %v1148
    %v1153 = vsel %vm1145, %v1140, %v1149
    %v1154 = vpack.c.bf16 %v1152, %v1150
    %v1155 = vpack.c.bf16 %v1153, %v1151
    %v1156 = vld [vmem:[%s5] sm:$0xf]
    %v1157 = vld [vmem:[%s5 + $0x4] sm:$0xf]
    %v1158 = vld [vmem:[%s5 + $0x8] sm:$0xf]
    %v1159 = vld [vmem:[%s5 + $0xc] sm:$0xf]
    %v1160 = vld [vmem:[%s5 + $0x10] sm:$0xf]
    %v1161 = vld [vmem:[%s5 + $0x14] sm:$0xf]
    %v1162 = vld [vmem:[%s5 + $0x18] sm:$0xf]
    %v1163 = vld [vmem:[%s5 + $0x1c] sm:$0xf]
    %v1164 = vld [vmem:[%s5 + $0x20] sm:$0xf]
    %v1165 = vld [vmem:[%s5 + $0x24] sm:$0xf]
    %v1166 = vld [vmem:[%s5 + $0x28] sm:$0xf]
    %v1167 = vld [vmem:[%s5 + $0x2c] sm:$0xf]
    %v1168 = vld [vmem:[%s5 + $0x30] sm:$0xf]
    %v1169 = vld [vmem:[%s5 + $0x34] sm:$0xf]
    %v1170 = vld [vmem:[%s5 + $0x38] sm:$0xf]
    %v1171 = vld [vmem:[%s5 + $0x3c] sm:$0xf]
    %v1172 = vld [vmem:[%s5 + $0x40] sm:$0xf]
    %v1173 = vld [vmem:[%s5 + $0x44] sm:$0xf]
    %v1174 = vld [vmem:[%s5 + $0x48] sm:$0xf]
    %v1175 = vld [vmem:[%s5 + $0x4c] sm:$0xf]
    %v1176 = vld [vmem:[%s5 + $0x50] sm:$0xf]
    %v1177 = vld [vmem:[%s5 + $0x54] sm:$0xf]
    %v1178 = vld [vmem:[%s5 + $0x58] sm:$0xf]
    %v1179 = vld [vmem:[%s5 + $0x5c] sm:$0xf]
    %v1180 = vld [vmem:[%s5 + $0x60] sm:$0xf]
    %v1181 = vld [vmem:[%s5 + $0x64] sm:$0xf]
    %v1182 = vld [vmem:[%s5 + $0x68] sm:$0xf]
    %v1183 = vld [vmem:[%s5 + $0x6c] sm:$0xf]
    %v1184 = vld [vmem:[%s5 + $0x70] sm:$0xf]
    %v1185 = vld [vmem:[%s5 + $0x74] sm:$0xf]
    %v1186 = vld [vmem:[%s5 + $0x78] sm:$0xf]
    %v1187 = vld [vmem:[%s5 + $0x7c] sm:$0xf]
    %v1188 = vld [vmem:[%s6] sm:$0x1]
    %v1190 = vperm.slane %v1188, 0
    %v1224 = vunpack.c.l.b16 %v1156
    %v1225 = vunpack.c.l.b16 %v1157
    %v1226 = vunpack.c.l.b16 %v1158
    %v1227 = vunpack.c.l.b16 %v1159
    %v1228 = vunpack.c.l.b16 %v1160
    %v1229 = vunpack.c.l.b16 %v1161
    %v1230 = vunpack.c.l.b16 %v1162
    %v1231 = vunpack.c.l.b16 %v1163
    %v1232 = vunpack.c.l.b16 %v1164
    %v1233 = vunpack.c.l.b16 %v1165
    %v1234 = vunpack.c.l.b16 %v1166
    %v1235 = vunpack.c.l.b16 %v1167
    %v1236 = vunpack.c.l.b16 %v1168
    %v1237 = vunpack.c.l.b16 %v1169
    %v1238 = vunpack.c.l.b16 %v1170
    %v1239 = vunpack.c.l.b16 %v1171
    %v1240 = vunpack.c.l.b16 %v1172
    %v1241 = vunpack.c.l.b16 %v1173
    %v1242 = vunpack.c.l.b16 %v1174
    %v1243 = vunpack.c.l.b16 %v1175
    %v1244 = vunpack.c.l.b16 %v1176
    %v1245 = vunpack.c.l.b16 %v1177
    %v1246 = vunpack.c.l.b16 %v1178
    %v1247 = vunpack.c.l.b16 %v1179
    %v1248 = vunpack.c.l.b16 %v1180
    %v1249 = vunpack.c.l.b16 %v1181
    %v1250 = vunpack.c.l.b16 %v1182
    %v1251 = vunpack.c.l.b16 %v1183
    %v1252 = vunpack.c.l.b16 %v1184
    %v1253 = vunpack.c.l.b16 %v1185
    %v1254 = vunpack.c.l.b16 %v1186
    %v1255 = vunpack.c.l.b16 %v1187
    %v1256 = vpack.c.b16 %v1225, %v1224
    %v1257 = vpack.c.b16 %v1227, %v1226
    %v1258 = vpack.c.b16 %v1229, %v1228
    %v1259 = vpack.c.b16 %v1231, %v1230
    %v1260 = vpack.c.b16 %v1233, %v1232
    %v1261 = vpack.c.b16 %v1235, %v1234
    %v1262 = vpack.c.b16 %v1237, %v1236
    %v1263 = vpack.c.b16 %v1239, %v1238
    %v1264 = vpack.c.b16 %v1241, %v1240
    %v1265 = vpack.c.b16 %v1243, %v1242
    %v1266 = vpack.c.b16 %v1245, %v1244
    %v1267 = vpack.c.b16 %v1247, %v1246
    %v1268 = vpack.c.b16 %v1249, %v1248
    %v1269 = vpack.c.b16 %v1251, %v1250
    %v1270 = vpack.c.b16 %v1253, %v1252
    %v1271 = vpack.c.b16 %v1255, %v1254
    %1288 = vmatpush.bf16.msra.mxu0 %v1263
    %1289 = vmatpush.bf16.msra.mxu0 %v1262
    %1290 = vmatpush.bf16.msra.mxu0 %v1261
    %1291 = vmatpush.bf16.msra.mxu0 %v1260
    %1292 = vmatpush.bf16.msra.mxu0 %v1259
    %1293 = vmatpush.bf16.msra.mxu0 %v1258
    %1294 = vmatpush.bf16.msra.mxu0 %v1257
    %1295 = vmatpush.bf16.msra.mxu0 %v1256
    %1296 = vmatmul.bf16.gmra.mxu0 %v1154
    %v1297 = vpop.f32.mrf.mxu0
    %v1298 = vadd.f32 %v1190, %v1297
    %v1299 = vpop.f32.mrf.mxu0
    %v1300 = vadd.f32 %v1190, %v1299
    %1301 = vdwg.mxu0
    %1302 = vmatpush.bf16.msra.mxu0 %v1271
    %1303 = vmatpush.bf16.msra.mxu0 %v1270
    %1304 = vmatpush.bf16.msra.mxu0 %v1269
    %1305 = vmatpush.bf16.msra.mxu0 %v1268
    %1306 = vmatpush.bf16.msra.mxu0 %v1267
    %1307 = vmatpush.bf16.msra.mxu0 %v1266
    %1308 = vmatpush.bf16.msra.mxu0 %v1265
    %1309 = vmatpush.bf16.msra.mxu0 %v1264
    %1310 = vmatmul.bf16.gmra.mxu0 %v1155
    %v1311 = vpop.f32.mrf.mxu0
    %v1312 = vadd.f32 %v1298, %v1311
    %v1313 = vpop.f32.mrf.mxu0
    %v1314 = vadd.f32 %v1300, %v1313
    %1315 = vdwg.mxu0
    %vm1316 = vcmp.gt.f32.partialorder %v1312, 0.0
    %vm1317 = vcmp.gt.f32.partialorder %v1314, 0.0
    %v1318 = vmul.f32 %v1312, 0.01
    %v1319 = vmul.f32 %v1314, 0.01
    %v1320 = vsel %vm1316, %v1312, %v1318
    %v1321 = vsel %vm1317, %v1314, %v1319
    %v1322 = vpack.c.bf16 %v1320, %v1320
    %v1323 = vpack.c.bf16 %v1321, %v1321
    %1324 = vst [vmem:[%s7] sm:$0xf] %v1322
    %1325 = vst [vmem:[%s7 + $0x4] sm:$0xf] %v1323
    // Predicated region
    $region38: #{mlp_forward.1} parent=1 // pred_check
      _
    $region39: #{mlp_forward.1} parent=1 // pred_check_branch
      %1327 = sbr.rel (0) target = $region41
    $region40: #{mlp_forward.1} parent=1 // pred_region
      _
    $region41: #{mlp_forward.1} parent=1 // pred_fallthru
      _
    // Predicated region
    $region42: #{mlp_forward.1} parent=1 // pred_check
      _
    $region43: #{mlp_forward.1} parent=1 // pred_check_branch
      %1329 = sbr.rel (0) target = $region45
    $region44: #{mlp_forward.1} parent=1 // pred_region
      _
    $region45: #{mlp_forward.1} parent=1 // pred_fallthru
      _
    %1330 = vsyncpa [#allocation3], 1
    %1331 = vsyncpa [#allocation5], 1

</llo_original>
